<compile_context>
chip_gen: v5e
topology: v5e:2x2
jax: 0.10.0
libtpu: 0.0.40
codegen_flags: <defaults>
</compile_context>

<pallas_src>
import functools

import numpy as np

import jax
import jax.numpy as jnp
from jax.experimental import pallas as pl
from jax.experimental.pallas import tpu as pltpu


_LANE = 128
# Rows per grid step.  Per-step VMEM at tile=512, tn=256, K-block=128:
#   x 2*512*128*4 + w 2*128*256*4 + out 2*512*256*4 + acc 512*256*4 ~ 2.5 MiB
# -> safe on v5e/v6e (128 MiB) and v7x (64 MiB) without vmem_limit overrides.
_MAX_TILE_ROWS = 512


def _round_up(x: int, m: int) -> int:
    return -(-x // m) * m


def _band_kernel(k0_ref, x_ref, w_ref, o_ref, acc_ref):
    """One (row-tile, N-tile) output block, accumulated over its K band."""
    k = pl.program_id(2)

    @pl.when(k == 0)
    def _():
        acc_ref[...] = jnp.zeros_like(acc_ref)

    acc_ref[...] += jnp.dot(
        x_ref[...], w_ref[...], preferred_element_type=jnp.float32
    )

    @pl.when(k == pl.num_programs(2) - 1)
    def _():
        o_ref[...] = acc_ref[...].astype(o_ref.dtype)


@functools.lru_cache(maxsize=64)
def _band_weights(t_in: int, t_out: int, tn: int):
    """Band-blocked interpolation weights (PyTorch half-pixel convention).

    Returns:
      banded:  (n_blocks, k_window, tn) f32 numpy, the K window of the dense
               interpolation matrix for each N block (zero-padded).
      k0_blk:  (n_blocks,) int32 numpy, 128-block K start of each window.
      k_pad:   T_in rounded up to 128 (input columns the kernel reads).
      n_pad:   T_out rounded up to tn (lane-dense output width).
    """
    k_pad = _round_up(t_in, _LANE)
    n_pad = _round_up(t_out, tn)

    scale = t_in / t_out
    j = np.arange(t_out, dtype=np.int64)
    src = np.maximum((j.astype(np.float64) + 0.5) * scale - 0.5, 0.0)
    i0 = np.minimum(np.floor(src).astype(np.int64), t_in - 1)
    i1 = np.minimum(i0 + 1, t_in - 1)
    w = (src - np.floor(src)).astype(np.float32)

    dense = np.zeros((k_pad, n_pad), dtype=np.float32)
    dense[i0, j] += 1.0 - w
    dense[i1, j] += w

    n_blocks = n_pad // tn
    k_pad_blocks = k_pad // _LANE

    start_blk = np.zeros(n_blocks, dtype=np.int64)
    width_blks = 1
    for jb in range(n_blocks):
        cols = dense[:, jb * tn:(jb + 1) * tn]
        nz = np.flatnonzero(cols.any(axis=1))
        if nz.size:
            sb = int(nz[0]) // _LANE
            eb = int(nz[-1]) // _LANE + 1
        else:  # pure padding block (columns >= t_out)
            sb, eb = 0, 1
        start_blk[jb] = sb
        width_blks = max(width_blks, eb - sb)

    width_blks = min(width_blks, k_pad_blocks)
    start_blk = np.minimum(start_blk, k_pad_blocks - width_blks)
    k_window = width_blks * _LANE

    banded = np.zeros((n_blocks, k_window, tn), dtype=np.float32)
    for jb in range(n_blocks):
        s = int(start_blk[jb]) * _LANE
        banded[jb] = dense[s:s + k_window, jb * tn:(jb + 1) * tn]

    return banded, start_blk.astype(np.int32), k_pad, n_pad


@functools.partial(
    jax.jit,
    static_argnames=("new_length", "k_pad", "n_pad", "tn", "tile_rows",
                     "out_dtype"),
)
def _resample_rows(x2, w, k0, *, new_length, k_pad, n_pad, tn, tile_rows,
                   out_dtype):
    rows, t_in = x2.shape
    if t_in < k_pad:  # zero columns hit zero weight rows -> result unchanged
        x2 = jnp.pad(x2, ((0, 0), (0, k_pad - t_in)))
    k_blocks = w.shape[1] // _LANE
    grid = (pl.cdiv(rows, tile_rows), n_pad // tn, k_blocks)

    out = pl.pallas_call(
        _band_kernel,
        out_shape=jax.ShapeDtypeStruct((rows, n_pad), jnp.dtype(out_dtype)),
        grid_spec=pltpu.PrefetchScalarGridSpec(
            num_scalar_prefetch=1,
            grid=grid,
            in_specs=[
                # x: (tile_rows, 128) K blocks, start offset comes from the
                # scalar-prefetched per-N-block band start.
                pl.BlockSpec((tile_rows, _LANE),
                             lambda i, j, k, k0r: (i, k0r[j] + k)),
                # banded weight: (128, tn) slab for N block j, K step k.
                pl.BlockSpec((None, _LANE, tn),
                             lambda i, j, k, k0r: (j, k, 0)),
            ],
            out_specs=pl.BlockSpec((tile_rows, tn),
                                   lambda i, j, k, k0r: (i, j)),
            scratch_shapes=[pltpu.VMEM((tile_rows, tn), jnp.float32)],
        ),
        compiler_params=pltpu.CompilerParams(
            # N axis parallel too, so a single small spectrogram still feeds
            # both v7x TensorCores; K (reduction) axis last / arbitrary.
            dimension_semantics=("parallel", "parallel", "arbitrary"),
        ),
    )(k0, x2, w)
    return out[:, :new_length]


def time_resample(x: jax.Array, new_length: int) -> jax.Array:
    """Linear (half-pixel) resample of the last axis of `x` to `new_length`."""
    orig_dtype = x.dtype
    lead = x.shape[:-1]
    t_in = x.shape[-1]

    rows = 1
    for d in lead:
        rows *= d
    rows = max(rows, 1)

    # bf16 stays bf16 (bf16 MXU, half the HBM traffic); everything else f32.
    compute_dtype = jnp.bfloat16 if orig_dtype == jnp.bfloat16 else jnp.float32
    out_dtype = (orig_dtype if jnp.issubdtype(orig_dtype, jnp.floating)
                 else jnp.float32)

    tn = 256 if new_length >= 256 else _LANE
    banded_np, k0_np, k_pad, n_pad = _band_weights(t_in, int(new_length), tn)

    tile_rows = rows if rows <= _MAX_TILE_ROWS else _MAX_TILE_ROWS

    x2 = x.reshape(rows, t_in)
    if x2.dtype != compute_dtype:
        x2 = x2.astype(compute_dtype)
    w = jnp.asarray(banded_np, dtype=compute_dtype)
    k0 = jnp.asarray(k0_np)

    out = _resample_rows(
        x2, w, k0,
        new_length=int(new_length), k_pad=k_pad, n_pad=n_pad, tn=tn,
        tile_rows=tile_rows, out_dtype=jnp.dtype(out_dtype).name,
    )
    # Non-float inputs are returned as float32 (interpolation is only defined
    # on floats, mirroring PyTorch).
    return out.reshape(*lead, int(new_length))


class RandomTimeResample:
    """JAX/Pallas port of the PyTorch RandomTimeResample augmentation.

    The resize factor is sampled host-side with numpy (PyTorch also samples on
    the host and calls .item()): the resampled length determines the output
    shape, which must be static under JAX, and host sampling avoids a device
    sync per call.
    """

    def __init__(self, factor, seed: int = 0):
        self.factor = factor
        self._rng = np.random.default_rng(seed)

    def __call__(self, x: jax.Array, rng=None) -> jax.Array:
        rng = self._rng if rng is None else rng
        f = float(rng.uniform(self.factor[0], self.factor[1]))
        # PyTorch: new_data_length = round(data_length * factor)
        new_length = int(round(x.shape[-1] * f))
        return time_resample(x, new_length)


if __name__ == "__main__":
    key = jax.random.PRNGKey(0)

    # Small spectrogram-like input: (freq=40, time=100) — the module's forward
    # implies a 2-D (freq, time) tensor.
    freq, time = 40, 100
    x = jax.random.normal(key, (freq, time), dtype=jnp.float32)

    module = RandomTimeResample(factor=(0.8, 1.2), seed=0)
    y = module(x)
    y = jax.block_until_ready(y)

    # Reference: gather-based linear interpolation with PyTorch's half-pixel
    # (align_corners=False) convention, computed in plain numpy.
    t_out = y.shape[-1]
    xn = np.asarray(x)
    scale = time / t_out
    src = np.maximum((np.arange(t_out) + 0.5) * scale - 0.5, 0.0)
    i0 = np.minimum(np.floor(src).astype(np.int64), time - 1)
    i1 = np.minimum(i0 + 1, time - 1)
    wgt = (src - np.floor(src)).astype(np.float32)
    y_ref = xn[:, i0] * (1.0 - wgt) + xn[:, i1] * wgt

    assert y.shape == (freq, t_out), (y.shape, (freq, t_out))
    assert y.dtype == jnp.float32
    np.testing.assert_allclose(np.asarray(y), y_ref, rtol=1e-5, atol=1e-5)

    print("KERNEL_OK")
</pallas_src>

<mosaic_0001>
module attributes {stable_mosaic.version = 11 : i64} {
  func.func @_band_kernel(%arg0: i32, %arg1: i32, %arg2: i32, %arg3: memref<1xi32, #tpu.memory_space<smem>>, %arg4: memref<40x128xf32, #tpu.memory_space<vmem>>, %arg5: memref<1x128x128xf32, #tpu.memory_space<vmem>>, %arg6: memref<40x128xf32, #tpu.memory_space<vmem>>, %arg7: memref<40x128xf32, #tpu.memory_space<vmem>>) attributes {dimension_semantics = [#tpu.dimension_semantics<parallel>, #tpu.dimension_semantics<parallel>, #tpu.dimension_semantics<arbitrary>], iteration_bounds = array<i64: 1, 1, 1>, scalar_prefetch = 1 : i64, scratch_operands = 1 : i64, tpu.core_type = #tpu.core_type<tc>, window_params = [{transform_indices = @transform_0, window_bounds = array<i64: 40, 128>}, {transform_indices = @transform_1, window_bounds = array<i64: 1, 128, 128>}, {transform_indices = @transform_2, window_bounds = array<i64: 40, 128>}]} {
    %c0_i32 = arith.constant 0 : i32
    %0 = arith.cmpi eq, %arg2, %c0_i32 : i32
    %1 = arith.extui %0 : i1 to i32
    %c0_i32_0 = arith.constant 0 : i32
    %2 = arith.cmpi ne, %1, %c0_i32_0 : i32
    scf.if %2 {
      %cst_11 = arith.constant 0.000000e+00 : f32
      %13 = vector.broadcast %cst_11 : f32 to vector<40x128xf32>
      %c0_12 = arith.constant 0 : index
      %c0_13 = arith.constant 0 : index
      %14 = vector.load %arg7[%c0_12, %c0_13] : memref<40x128xf32, #tpu.memory_space<vmem>>, vector<40x128xf32>
      tpu.vector_store %arg7[%c0_12, %c0_13], %13 {strides = array<i32>} : memref<40x128xf32, #tpu.memory_space<vmem>>, vector<40x128xf32>,
    } else {
    }
    %c0 = arith.constant 0 : index
    %c0_1 = arith.constant 0 : index
    %3 = vector.load %arg7[%c0, %c0_1] : memref<40x128xf32, #tpu.memory_space<vmem>>, vector<40x128xf32>
    %c0_2 = arith.constant 0 : index
    %c0_3 = arith.constant 0 : index
    %4 = vector.load %arg4[%c0_2, %c0_3] : memref<40x128xf32, #tpu.memory_space<vmem>>, vector<40x128xf32>
    %c0_4 = arith.constant 0 : index
    %c0_5 = arith.constant 0 : index
    %c0_6 = arith.constant 0 : index
    %5 = vector.load %arg5[%c0_4, %c0_5, %c0_6] : memref<1x128x128xf32, #tpu.memory_space<vmem>>, vector<1x128x128xf32>
    %6 = vector.shape_cast %5 : vector<1x128x128xf32> to vector<128x128xf32>
    %cst = arith.constant dense<0.000000e+00> : vector<40x128xf32>
    %7 = tpu.matmul %4, %6, %cst {dimension_numbers = #tpu.dot_dimension_numbers<[1], [0], [0], [1], [0, 0, 1, 1], [], []>} : vector<40x128xf32>, vector<128x128xf32>, vector<40x128xf32> -> vector<40x128xf32>
    %8 = arith.addf %3, %7 : vector<40x128xf32>
    %c0_7 = arith.constant 0 : index
    %c0_8 = arith.constant 0 : index
    %9 = vector.load %arg7[%c0_7, %c0_8] : memref<40x128xf32, #tpu.memory_space<vmem>>, vector<40x128xf32>
    tpu.vector_store %arg7[%c0_7, %c0_8], %8 {strides = array<i32>} : memref<40x128xf32, #tpu.memory_space<vmem>>, vector<40x128xf32>,
    %c0_i32_9 = arith.constant 0 : i32
    %10 = arith.cmpi eq, %arg2, %c0_i32_9 : i32
    %11 = arith.extui %10 : i1 to i32
    %c0_i32_10 = arith.constant 0 : i32
    %12 = arith.cmpi ne, %11, %c0_i32_10 : i32
    scf.if %12 {
      %c0_11 = arith.constant 0 : index
      %c0_12 = arith.constant 0 : index
      %13 = vector.load %arg7[%c0_11, %c0_12] : memref<40x128xf32, #tpu.memory_space<vmem>>, vector<40x128xf32>
      %c0_13 = arith.constant 0 : index
      %c0_14 = arith.constant 0 : index
      %14 = vector.load %arg6[%c0_13, %c0_14] : memref<40x128xf32, #tpu.memory_space<vmem>>, vector<40x128xf32>
      tpu.vector_store %arg6[%c0_13, %c0_14], %13 {strides = array<i32>} : memref<40x128xf32, #tpu.memory_space<vmem>>, vector<40x128xf32>,
    } else {
    }
    return
  }
  func.func @transform_0(%arg0: i32, %arg1: i32, %arg2: i32, %arg3: memref<1xi32, #tpu.memory_space<smem>>) -> (i32, i32) {
    %0 = arith.index_cast %arg1 : i32 to index
    %1 = memref.load %arg3[%0] : memref<1xi32, #tpu.memory_space<smem>>
    %2 = arith.addi %1, %arg2 : i32
    %c0_i32 = arith.constant 0 : i32
    return %arg0, %2 : i32, i32
  }
  func.func @transform_1(%arg0: i32, %arg1: i32, %arg2: i32, %arg3: memref<1xi32, #tpu.memory_space<smem>>) -> (i32, i32, i32) {
    %c0_i32 = arith.constant 0 : i32
    %c0_i32_0 = arith.constant 0 : i32
    return %arg1, %arg2, %c0_i32 : i32, i32, i32
  }
  func.func @transform_2(%arg0: i32, %arg1: i32, %arg2: i32, %arg3: memref<1xi32, #tpu.memory_space<smem>>) -> (i32, i32) {
    %c0_i32 = arith.constant 0 : i32
    return %arg0, %arg1 : i32, i32
  }
}

</mosaic_0001>

<llo_original>
// kernel: _resample_rows.1
$region0: #{_resample_rows.1}
  #allocation0 [shape = 'u32[]', space=smem, size = 0x4, offset = 0x4, fixed_abs, tag = 'smem constant byte address 0x4 - core index']
  #allocation1 [shape = 'u32[72,128]{1,0:T(1,128)}', space=vmem, size = 0x9000, scoped, tag = 'internal scratch']
  #allocation2 [shape = 'f32[40,128]{1,0:T(8,128)}', space=vmem, size = 0x5000, scoped, tag = 'scratch operand']
  #allocation3 [shape = 's32[1]{0}', space=sflag, size = 0x4, scoped, tag = 'scoped memory for _resample_rows.1']
  #allocation4 [shape = 's32[1]{0:T(128)S(6)}', space=smem, size = 0x200, scoped, tag = 'prefetched SMEM operand 0']
  %s0 = inlined_call_operand.<no memory space> [shape: s32[1], index: 0, kind: input, shape index: {}]
  %s1 = inlined_call_operand.vmem [shape: f32[40,128], index: 1, kind: input, shape index: {}]
  %s2 = inlined_call_operand.hbm [shape: f32[1,128,128], index: 2, kind: input, shape index: {}]
  %s3 = inlined_call_operand.hbm [shape: f32[40,128], index: 3, kind: output, shape index: {}]
  %s4 = sld [smem:[#allocation0]]
  $region30: #{_resample_rows.1} parent=0
    _
  %s6 = ssub.s32 1, %s4
  %s7 = scalar_select 0, %s6, %s4
  %8 = sst [smem:[#allocation4]] %s0
  $region1: #{_resample_rows.1} parent=0
    #allocation5 [shape = 'u8[65536]{0}', space=vmem, size = 0x10000, scoped, tag = 'input window, operand 2, single buffered']
    #allocation6 [shape = 's32[1]{0}', space=sflag, size = 0x4, scoped, tag = 'scoped memory for _resample_rows.1']
    #allocation7 [shape = 's32[1]{0}', space=sflag, size = 0x4, scoped, tag = 'scoped memory for _resample_rows.1']
    #allocation8 [shape = 'u8[20480]{0}', space=vmem, size = 0x5000, scoped, tag = 'output window, operand 0, single buffered']
    %9 = vsyncpa [#allocation6], 0
    %10 = vsyncpa [#allocation7], 0
    // Predicated region
    $region2: #{_resample_rows.1} parent=1 // pred_check
      _
    $region3: #{_resample_rows.1} parent=1 // pred_check_branch
      %12 = sbr.rel (0) target = $region5
    $region4: #{_resample_rows.1} parent=1 // pred_region
      %s13 = sld [smem:[#allocation4]]
      %s14 = sadd.s32 %s13, 0
      %p15 = scmp.lt.s32.totalorder %s14, 0
      %s16 = scalar_select %p15, %s14, 0
      %s17 = smul.addr %s16, 8
      %s18 = scalar_lea.vmem %s1, %s17
      %s19 = sld [smem:[#allocation4]]
      %s20 = sadd.s32 %s19, 0
    $region5: #{_resample_rows.1} parent=1 // pred_fallthru
      _
    // Predicated region
    $region6: #{_resample_rows.1} parent=1 // pred_check
      _
    $region7: #{_resample_rows.1} parent=1 // pred_check_branch
      %22 = sbr.rel (0) target = $region9
    $region8: #{_resample_rows.1} parent=1 // pred_region
      %24 = vsyncadd [#allocation6], 0
      %s25 = sshll.u32 %s2, 4
      %s26 = int_to_ptr.hbm [resolvable:$true] %s25
      %s27 = sshll.u32 [#allocation5], 4
      %s28 = int_to_ptr.vmem [resolvable:$true] %s27
      %33 = dma.hbm_to_vmem [thread:$0]  %s26, 2048, %s28, [#allocation6], 128, 128, 8
    $region9: #{_resample_rows.1} parent=1 // pred_fallthru
      _
    // Predicated region
    $region10: #{_resample_rows.1} parent=1 // pred_check
      _
    $region11: #{_resample_rows.1} parent=1 // pred_check_branch
      %35 = sbr.rel (0) target = $region13
    $region12: #{_resample_rows.1} parent=1 // pred_region
      %37 = dma.done [#allocation6], 2048
    $region13: #{_resample_rows.1} parent=1 // pred_fallthru
      _
    %s38 = sld [smem:[#allocation4]]
    %s39 = sadd.s32 %s38, 0
    %p40 = scmp.lt.s32.totalorder %s39, 0
    %s41 = scalar_select %p40, %s39, 0
    %s42 = smul.addr %s41, 8
    %s43 = scalar_lea.vmem %s1, %s42
    %s44 = sld [smem:[#allocation4]]
    %s45 = sadd.s32 %s44, 0
    %p46 = scmp.lt.s32.totalorder %s45, 0
    %s47 = scalar_select %p46, %s45, 0
    %s48 = smul.addr %s47, 8
    %s49 = scalar_lea.vmem %s1, %s48
    %s50 = sld [smem:[#allocation4]]
    %s51 = sadd.s32 %s50, 0
    %p52 = scmp.eq.s32.totalorder 0, 0
    // Predicated region
    $region14: #{_resample_rows.1} parent=1 // pred_check
      %p53 = pneg %p52
    $region15: #{_resample_rows.1} parent=1 // pred_check_branch
      %55 = sbr.rel (%p53) target = $region17
    $region16: #{_resample_rows.1} parent=1 // pred_region
      %56 = vst [vmem:[#allocation2] sm:$0xff] 0.0
      %57 = vst [vmem:[#allocation2 + $0x8] sm:$0xff] 0.0
      %58 = vst [vmem:[#allocation2 + $0x10] sm:$0xff] 0.0
      %59 = vst [vmem:[#allocation2 + $0x18] sm:$0xff] 0.0
      %60 = vst [vmem:[#allocation2 + $0x20] sm:$0xff] 0.0
    $region17: #{_resample_rows.1} parent=1 // pred_fallthru
      _
    %v61 = vld [vmem:[#allocation2] sm:$0xff]
    %v62 = vld [vmem:[#allocation2 + $0x8] sm:$0xff]
    %v63 = vld [vmem:[#allocation2 + $0x10] sm:$0xff]
    %v64 = vld [vmem:[#allocation2 + $0x18] sm:$0xff]
    %v65 = vld [vmem:[#allocation2 + $0x20] sm:$0xff]
    %v66 = vld [vmem:[%s49] sm:$0xff]
    %v67 = vld [vmem:[%s49 + $0x8] sm:$0xff]
    %v68 = vld [vmem:[%s49 + $0x10] sm:$0xff]
    %v69 = vld [vmem:[%s49 + $0x18] sm:$0xff]
    %v70 = vld [vmem:[%s49 + $0x20] sm:$0xff]
    %v71 = vld [vmem:[#allocation5] sm:$0xff]
    %v72 = vld [vmem:[#allocation5 + $0x8] sm:$0xff]
    %v73 = vld [vmem:[#allocation5 + $0x10] sm:$0xff]
    %v74 = vld [vmem:[#allocation5 + $0x18] sm:$0xff]
    %v75 = vld [vmem:[#allocation5 + $0x20] sm:$0xff]
    %v76 = vld [vmem:[#allocation5 + $0x28] sm:$0xff]
    %v77 = vld [vmem:[#allocation5 + $0x30] sm:$0xff]
    %v78 = vld [vmem:[#allocation5 + $0x38] sm:$0xff]
    %v79 = vld [vmem:[#allocation5 + $0x40] sm:$0xff]
    %v80 = vld [vmem:[#allocation5 + $0x48] sm:$0xff]
    %v81 = vld [vmem:[#allocation5 + $0x50] sm:$0xff]
    %v82 = vld [vmem:[#allocation5 + $0x58] sm:$0xff]
    %v83 = vld [vmem:[#allocation5 + $0x60] sm:$0xff]
    %v84 = vld [vmem:[#allocation5 + $0x68] sm:$0xff]
    %v85 = vld [vmem:[#allocation5 + $0x70] sm:$0xff]
    %v86 = vld [vmem:[#allocation5 + $0x78] sm:$0xff]
    %87 = vmatpush.msra.mxu0 %v86
    %88 = vmatpush.msra.mxu0 %v85
    %89 = vmatpush.msra.mxu0 %v84
    %90 = vmatpush.msra.mxu0 %v83
    %91 = vmatpush.msra.mxu0 %v82
    %92 = vmatpush.msra.mxu0 %v81
    %93 = vmatpush.msra.mxu0 %v80
    %94 = vmatpush.msra.mxu0 %v79
    %95 = vmatpush.msra.mxu0 %v78
    %96 = vmatpush.msra.mxu0 %v77
    %97 = vmatpush.msra.mxu0 %v76
    %98 = vmatpush.msra.mxu0 %v75
    %99 = vmatpush.msra.mxu0 %v74
    %100 = vmatpush.msra.mxu0 %v73
    %101 = vmatpush.msra.mxu0 %v72
    %102 = vmatpush.msra.mxu0 %v71
    %103 = vmatmul.f32.gmra.mxu0 %v66
    %v104 = vpop.f32.mrf.mxu0
    %v105 = vadd.f32 0.0, %v104
    %106 = vmatmul.f32.gmra.mxu0 %v67
    %v107 = vpop.f32.mrf.mxu0
    %v108 = vadd.f32 0.0, %v107
    %109 = vmatmul.f32.gmra.mxu0 %v68
    %v110 = vpop.f32.mrf.mxu0
    %v111 = vadd.f32 0.0, %v110
    %112 = vmatmul.f32.gmra.mxu0 %v69
    %v113 = vpop.f32.mrf.mxu0
    %v114 = vadd.f32 0.0, %v113
    %115 = vmatmul.f32.gmra.mxu0 %v70
    %v116 = vpop.f32.mrf.mxu0
    %v117 = vadd.f32 0.0, %v116
    %118 = vdwg.mxu0
    %v119 = vadd.f32 %v61, %v105
    %v120 = vadd.f32 %v62, %v108
    %v121 = vadd.f32 %v63, %v111
    %v122 = vadd.f32 %v64, %v114
    %v123 = vadd.f32 %v65, %v117
    %124 = vst [vmem:[#allocation2] sm:$0xff] %v119
    %125 = vst [vmem:[#allocation2 + $0x8] sm:$0xff] %v120
    %126 = vst [vmem:[#allocation2 + $0x10] sm:$0xff] %v121
    %127 = vst [vmem:[#allocation2 + $0x18] sm:$0xff] %v122
    %128 = vst [vmem:[#allocation2 + $0x20] sm:$0xff] %v123
    // Predicated region
    $region18: #{_resample_rows.1} parent=1 // pred_check
      %p129 = pneg %p52
    $region19: #{_resample_rows.1} parent=1 // pred_check_branch
      %131 = sbr.rel (%p129) target = $region21
    $region20: #{_resample_rows.1} parent=1 // pred_region
      %v132 = vld [vmem:[#allocation2] sm:$0xff]
      %v133 = vld [vmem:[#allocation2 + $0x8] sm:$0xff]
      %v134 = vld [vmem:[#allocation2 + $0x10] sm:$0xff]
      %v135 = vld [vmem:[#allocation2 + $0x18] sm:$0xff]
      %v136 = vld [vmem:[#allocation2 + $0x20] sm:$0xff]
      %137 = vst [vmem:[#allocation8] sm:$0xff] %v132
      %138 = vst [vmem:[#allocation8 + $0x8] sm:$0xff] %v133
      %139 = vst [vmem:[#allocation8 + $0x10] sm:$0xff] %v134
      %140 = vst [vmem:[#allocation8 + $0x18] sm:$0xff] %v135
      %141 = vst [vmem:[#allocation8 + $0x20] sm:$0xff] %v136
    $region21: #{_resample_rows.1} parent=1 // pred_fallthru
      _
    // Predicated region
    $region22: #{_resample_rows.1} parent=1 // pred_check
      _
    $region23: #{_resample_rows.1} parent=1 // pred_check_branch
      %143 = sbr.rel (0) target = $region25
    $region24: #{_resample_rows.1} parent=1 // pred_region
      %145 = vsyncadd [#allocation7], 0
      %s146 = sshll.u32 [#allocation8], 4
      %s147 = int_to_ptr.vmem [resolvable:$true] %s146
      %s148 = sshll.u32 %s3, 4
      %s149 = int_to_ptr.hbm [resolvable:$true] %s148
      %154 = dma.vmem_to_hbm [thread:$0]  %s147, 640, %s149, [#allocation7], 128, 128, 8
    $region25: #{_resample_rows.1} parent=1 // pred_fallthru
      _
    // Predicated region
    $region26: #{_resample_rows.1} parent=1 // pred_check
      _
    $region27: #{_resample_rows.1} parent=1 // pred_check_branch
      %156 = sbr.rel (0) target = $region29
    $region28: #{_resample_rows.1} parent=1 // pred_region
      %158 = dma.done [#allocation7], 640
    $region29: #{_resample_rows.1} parent=1 // pred_fallthru
      _
    %159 = vsyncpa [#allocation6], 1
    %160 = vsyncpa [#allocation7], 1

</llo_original>
